<compile_context>
chip_gen: v5e
topology: v5e:2x2
jax: 0.10.0
libtpu: 0.0.40
codegen_flags: <defaults>
</compile_context>

<pallas_src>
import math

import jax
import jax.numpy as jnp
from jax.experimental import pallas as pl
from jax.experimental.pallas import tpu as pltpu

_LANE = 128
_SUBLANE = 8


def _round_up(x, m):
    return ((x + m - 1) // m) * m


def _pick_tk(d_pad, tn, budget_bytes=8 << 20):
    """Largest 128-multiple divisor of d_pad whose double-buffered weight
    tile (tk * tn * 4 B * 2) stays under the budget.  Falls back to 128."""
    cap = max(_LANE, budget_bytes // (2 * tn * 4))
    best = _LANE
    for m in range(1, d_pad // _LANE + 1):
        tk = m * _LANE
        if d_pad % tk == 0 and tk <= cap:
            best = tk
    return best


def _fc_kernel(x_ref, w_ref, b_ref, o_ref, acc_ref):
    """Grid = (M tiles, N tiles, K tiles); K (reduction) is the last axis.
    f32 accumulator scratch: bias-init at k==0, single cast/store at last k."""
    k = pl.program_id(2)

    @pl.when(k == 0)
    def _():
        acc_ref[...] = jnp.broadcast_to(
            b_ref[...].astype(jnp.float32), acc_ref.shape
        )

    # TODO(synk): for large compute-bound shapes, cast x/W tiles to bf16 here
    # (keeping the f32 accumulate) for 2-4x MXU throughput; kept f32 for exact
    # parity with the f32 nn.Linear reference.
    acc_ref[...] += jnp.dot(
        x_ref[...], w_ref[...], preferred_element_type=jnp.float32
    )

    @pl.when(k == pl.num_programs(2) - 1)
    def _():
        o_ref[...] = acc_ref[...].astype(o_ref.dtype)


def prepare_params(w_t, b):
    """One-time (outside the per-call jitted path) weight/bias preparation.

    Pads D up to a multiple of 128 with zeros (mathematically inert).  N is
    left untouched for N <= 1024 (full-dim blocks need no alignment); only
    very large N is padded to a multiple of 512 so it can be tiled."""
    D, N = w_t.shape
    d_pad = _round_up(D, _LANE)
    n_pad = N if N <= 1024 else _round_up(N, 512)
    if (d_pad, n_pad) != (D, N):
        w_t = jnp.pad(w_t, ((0, d_pad - D), (0, n_pad - N)))
    b2 = b.reshape(1, -1)
    if n_pad != N:
        b2 = jnp.pad(b2, ((0, 0), (0, n_pad - N)))
    return w_t, b2


@jax.jit
def fully_connected(x, w_t, b2):
    """x: (B, C, H, W) float32.  w_t: (D_pad, N_pad) from prepare_params.
    b2: (1, N_pad).  Returns (B, N_pad)."""
    B = x.shape[0]
    D = math.prod(x.shape[1:])
    D_pad, N_pad = w_t.shape

    x2 = x.reshape(B, D)                       # batch_flatten (row-major)

    # ---- tile plan (all static under jit) --------------------------------
    # v5e MXU is 128x128; v6e / v7x are 256x256.
    try:
        kind = jax.devices()[0].device_kind.lower()
    except Exception:
        kind = ""
    align = 128 if "v5" in kind else 256

    B_r = _round_up(B, _SUBLANE)
    # Whole batch in one M tile when small => the weight streams from HBM
    # exactly once (the W_t index_map ignores i).  For huge batches fall back
    # to 256-row tiles (MXU-aligned on every generation); this also gives the
    # second v7x TensorCore >=2 parallel M blocks to work on.
    tm = B_r if B_r <= 256 else 256
    B_pad = _round_up(B, tm)

    # N: full-dim block for modest N (no padding, no extra weight traffic);
    # 2*MXU-width tiles only for very large N (prepare_params guarantees
    # divisibility by 512, hence by 256 as well).
    tn = N_pad if N_pad <= 1024 else 2 * align

    # K: D_pad is already a minimal 128-multiple; tk divides it exactly.
    tk = _pick_tk(D_pad, tn)

    # Cheap per-call pad of x only (zero rows/cols are inert in the matmul).
    if (B_pad, D_pad) != (B, D):
        x2 = jnp.pad(x2, ((0, B_pad - B), (0, D_pad - D)))

    grid = (B_pad // tm, N_pad // tn, D_pad // tk)

    # Explicit VMEM budget: double-buffered x/W/bias/output tiles + the f32
    # accumulator scratch, with 2x headroom, capped well under v7x's 64 MiB.
    vmem_bytes = 4 * (2 * (tm * tk + tk * tn + tn) + 3 * tm * tn)
    vmem_limit = int(min(max(2 * vmem_bytes, 16 << 20), 48 << 20))

    out = pl.pallas_call(
        _fc_kernel,
        out_shape=jax.ShapeDtypeStruct((B_pad, N_pad), x.dtype),
        grid_spec=pltpu.PrefetchScalarGridSpec(
            num_scalar_prefetch=0,
            grid=grid,
            in_specs=[
                pl.BlockSpec((tm, tk), lambda i, j, k: (i, k)),   # x tile
                pl.BlockSpec((tk, tn), lambda i, j, k: (k, j)),   # W_t tile
                pl.BlockSpec((1, tn), lambda i, j, k: (0, j)),    # bias tile
            ],
            out_specs=pl.BlockSpec((tm, tn), lambda i, j, k: (i, j)),
            scratch_shapes=[pltpu.VMEM((tm, tn), jnp.float32)],
        ),
        compiler_params=pltpu.CompilerParams(
            dimension_semantics=("parallel", "parallel", "arbitrary"),
            vmem_limit_bytes=vmem_limit,
        ),
    )(x2, w_t, b2)

    # N is never padded for this model (N_pad == N); only trim batch rows,
    # so no large post-kernel copy is materialized.
    if B_pad != B:
        out = out[:B]
    return out


def init_params(key, in_channels, out_channels):
    """Deterministic init mimicking nn.Linear's uniform(-1/sqrt(in), 1/sqrt(in))."""
    k_w, k_b = jax.random.split(key)
    bound = 1.0 / (in_channels ** 0.5)
    # Stored already transposed: (in_channels, out_channels)
    w_t = jax.random.uniform(
        k_w, (in_channels, out_channels), jnp.float32, -bound, bound
    )
    b = jax.random.uniform(k_b, (out_channels,), jnp.float32, -bound, bound)
    return w_t, b


if __name__ == "__main__":
    key = jax.random.PRNGKey(0)
    k_x, k_p = jax.random.split(key)

    # Small shapes consistent with the module: flatten(2,4,16,16) -> D=1024.
    B, C, H, W = 2, 4, 16, 16
    in_channels = C * H * W       # 1024
    out_channels = 32

    x = jax.random.normal(k_x, (B, C, H, W), jnp.float32)
    w_t, b = init_params(k_p, in_channels, out_channels)

    # One-time param preparation (outside the per-call jitted path).
    w_t_p, b2 = prepare_params(w_t, b)

    y = fully_connected(x, w_t_p, b2)
    jax.block_until_ready(y)

    # Reference check against plain JAX (same math as torch Linear).
    y_ref = x.reshape(B, -1) @ w_t + b[None, :]
    assert y.shape == (B, out_channels)
    assert jnp.allclose(y, y_ref, atol=1e-4, rtol=1e-4)

    print("KERNEL_OK")
</pallas_src>

<mosaic_0001>
module attributes {stable_mosaic.version = 11 : i64} {
  func.func @_fc_kernel(%arg0: i32, %arg1: i32, %arg2: i32, %arg3: memref<8x1024xf32, #tpu.memory_space<vmem>>, %arg4: memref<1024x32xf32, #tpu.memory_space<vmem>>, %arg5: memref<1x32xf32, #tpu.memory_space<vmem>>, %arg6: memref<8x32xf32, #tpu.memory_space<vmem>>, %arg7: memref<8x32xf32, #tpu.memory_space<vmem>>) attributes {dimension_semantics = [#tpu.dimension_semantics<parallel>, #tpu.dimension_semantics<parallel>, #tpu.dimension_semantics<arbitrary>], iteration_bounds = array<i64: 1, 1, 1>, scalar_prefetch = 0 : i64, scratch_operands = 1 : i64, tpu.core_type = #tpu.core_type<tc>, window_params = [{transform_indices = @transform_0, window_bounds = array<i64: 8, 1024>}, {transform_indices = @transform_1, window_bounds = array<i64: 1024, 32>}, {transform_indices = @transform_2, window_bounds = array<i64: 1, 32>}, {transform_indices = @transform_3, window_bounds = array<i64: 8, 32>}]} {
    %c0_i32 = arith.constant 0 : i32
    %0 = arith.cmpi eq, %arg2, %c0_i32 : i32
    %1 = arith.extui %0 : i1 to i32
    %c0_i32_0 = arith.constant 0 : i32
    %2 = arith.cmpi ne, %1, %c0_i32_0 : i32
    scf.if %2 {
      %c0_10 = arith.constant 0 : index
      %c0_11 = arith.constant 0 : index
      %12 = vector.load %arg5[%c0_10, %c0_11] : memref<1x32xf32, #tpu.memory_space<vmem>>, vector<1x32xf32>
      %13 = vector.shape_cast %12 : vector<1x32xf32> to vector<1x32xf32>
      %14 = vector.broadcast %13 : vector<1x32xf32> to vector<8x32xf32>
      %c0_12 = arith.constant 0 : index
      %c0_13 = arith.constant 0 : index
      %15 = vector.load %arg7[%c0_12, %c0_13] : memref<8x32xf32, #tpu.memory_space<vmem>>, vector<8x32xf32>
      tpu.vector_store %arg7[%c0_12, %c0_13], %14 {strides = array<i32>} : memref<8x32xf32, #tpu.memory_space<vmem>>, vector<8x32xf32>,
    } else {
    }
    %c0 = arith.constant 0 : index
    %c0_1 = arith.constant 0 : index
    %3 = vector.load %arg7[%c0, %c0_1] : memref<8x32xf32, #tpu.memory_space<vmem>>, vector<8x32xf32>
    %c0_2 = arith.constant 0 : index
    %c0_3 = arith.constant 0 : index
    %4 = vector.load %arg3[%c0_2, %c0_3] : memref<8x1024xf32, #tpu.memory_space<vmem>>, vector<8x1024xf32>
    %c0_4 = arith.constant 0 : index
    %c0_5 = arith.constant 0 : index
    %5 = vector.load %arg4[%c0_4, %c0_5] : memref<1024x32xf32, #tpu.memory_space<vmem>>, vector<1024x32xf32>
    %cst = arith.constant dense<0.000000e+00> : vector<8x32xf32>
    %6 = tpu.matmul %4, %5, %cst {dimension_numbers = #tpu.dot_dimension_numbers<[1], [0], [0], [1], [0, 0, 1, 1], [], []>} : vector<8x1024xf32>, vector<1024x32xf32>, vector<8x32xf32> -> vector<8x32xf32>
    %7 = arith.addf %3, %6 : vector<8x32xf32>
    %c0_6 = arith.constant 0 : index
    %c0_7 = arith.constant 0 : index
    %8 = vector.load %arg7[%c0_6, %c0_7] : memref<8x32xf32, #tpu.memory_space<vmem>>, vector<8x32xf32>
    tpu.vector_store %arg7[%c0_6, %c0_7], %7 {strides = array<i32>} : memref<8x32xf32, #tpu.memory_space<vmem>>, vector<8x32xf32>,
    %c0_i32_8 = arith.constant 0 : i32
    %9 = arith.cmpi eq, %arg2, %c0_i32_8 : i32
    %10 = arith.extui %9 : i1 to i32
    %c0_i32_9 = arith.constant 0 : i32
    %11 = arith.cmpi ne, %10, %c0_i32_9 : i32
    scf.if %11 {
      %c0_10 = arith.constant 0 : index
      %c0_11 = arith.constant 0 : index
      %12 = vector.load %arg7[%c0_10, %c0_11] : memref<8x32xf32, #tpu.memory_space<vmem>>, vector<8x32xf32>
      %c0_12 = arith.constant 0 : index
      %c0_13 = arith.constant 0 : index
      %13 = vector.load %arg6[%c0_12, %c0_13] : memref<8x32xf32, #tpu.memory_space<vmem>>, vector<8x32xf32>
      tpu.vector_store %arg6[%c0_12, %c0_13], %12 {strides = array<i32>} : memref<8x32xf32, #tpu.memory_space<vmem>>, vector<8x32xf32>,
    } else {
    }
    return
  }
  func.func @transform_0(%arg0: i32, %arg1: i32, %arg2: i32) -> (i32, i32) {
    %c0_i32 = arith.constant 0 : i32
    return %arg0, %arg2 : i32, i32
  }
  func.func @transform_1(%arg0: i32, %arg1: i32, %arg2: i32) -> (i32, i32) {
    %c0_i32 = arith.constant 0 : i32
    return %arg2, %arg1 : i32, i32
  }
  func.func @transform_2(%arg0: i32, %arg1: i32, %arg2: i32) -> (i32, i32) {
    %c0_i32 = arith.constant 0 : i32
    %c0_i32_0 = arith.constant 0 : i32
    return %c0_i32, %arg1 : i32, i32
  }
  func.func @transform_3(%arg0: i32, %arg1: i32, %arg2: i32) -> (i32, i32) {
    %c0_i32 = arith.constant 0 : i32
    return %arg0, %arg1 : i32, i32
  }
}

</mosaic_0001>

<llo_original>
// kernel: fully_connected.1
$region0: #{fully_connected.1}
  #allocation0 [shape = 'u32[]', space=smem, size = 0x4, offset = 0x4, fixed_abs, tag = 'smem constant byte address 0x4 - core index']
  #allocation1 [shape = 'u32[72,128]{1,0:T(1,128)}', space=vmem, size = 0x9000, scoped, tag = 'internal scratch']
  #allocation2 [shape = 'f32[8,32]{1,0:T(8,128)}', space=vmem, size = 0x1000, scoped, tag = 'scratch operand']
  %s0 = inlined_call_operand.vmem [shape: f32[8,1024], index: 0, kind: input, shape index: {}]
  %s1 = inlined_call_operand.vmem [shape: f32[1024,32], index: 1, kind: input, shape index: {}]
  %s2 = inlined_call_operand.vmem [shape: f32[1,32], index: 2, kind: input, shape index: {}]
  %s3 = inlined_call_operand.vmem [shape: f32[8,32], index: 3, kind: output, shape index: {}]
  %s4 = sld [smem:[#allocation0]]
  $region30: #{fully_connected.1} parent=0
    _
  %s6 = ssub.s32 1, %s4
  %s7 = scalar_select 0, %s6, %s4
  // Predicated region
  $region2: #{fully_connected.1} parent=0 // pred_check
    _
  $region3: #{fully_connected.1} parent=0 // pred_check_branch
    %9 = sbr.rel (0) target = $region5
  $region4: #{fully_connected.1} parent=0 // pred_region
    _
  $region5: #{fully_connected.1} parent=0 // pred_fallthru
    _
  // Predicated region
  $region6: #{fully_connected.1} parent=0 // pred_check
    _
  $region7: #{fully_connected.1} parent=0 // pred_check_branch
    %11 = sbr.rel (0) target = $region9
  $region8: #{fully_connected.1} parent=0 // pred_region
    _
  $region9: #{fully_connected.1} parent=0 // pred_fallthru
    _
  // Predicated region
  $region10: #{fully_connected.1} parent=0 // pred_check
    _
  $region11: #{fully_connected.1} parent=0 // pred_check_branch
    %13 = sbr.rel (0) target = $region13
  $region12: #{fully_connected.1} parent=0 // pred_region
    _
  $region13: #{fully_connected.1} parent=0 // pred_fallthru
    _
  %p14 = scmp.eq.s32.totalorder 0, 0
  // Predicated region
  $region14: #{fully_connected.1} parent=0 // pred_check
    %p15 = pneg %p14
  $region15: #{fully_connected.1} parent=0 // pred_check_branch
    %17 = sbr.rel (%p15) target = $region17
  $region16: #{fully_connected.1} parent=0 // pred_region
    %v18 = vld [vmem:[%s2] sm:$0x1]
    %v20 = vperm.slane %v18, 0
    %vm22 = vcmask 261120
    %23 = vst.msk [vmem:[#allocation2] sm:$0xff] %vm22, %v20
  $region17: #{fully_connected.1} parent=0 // pred_fallthru
    _
  %v24 = vld [vmem:[#allocation2] sm:$0xff]
  %v25 = vld [vmem:[%s0] sm:$0xff]
  %v26 = vld [vmem:[%s0 + $0x8] sm:$0xff]
  %v27 = vld [vmem:[%s0 + $0x10] sm:$0xff]
  %v28 = vld [vmem:[%s0 + $0x18] sm:$0xff]
  %v29 = vld [vmem:[%s0 + $0x20] sm:$0xff]
  %v30 = vld [vmem:[%s0 + $0x28] sm:$0xff]
  %v31 = vld [vmem:[%s0 + $0x30] sm:$0xff]
  %v32 = vld [vmem:[%s0 + $0x38] sm:$0xff]
  %v33 = vld [vmem:[%s1] sm:$0xff]
  %v34 = vld [vmem:[%s1 + $0x8] sm:$0xff]
  %v35 = vld [vmem:[%s1 + $0x10] sm:$0xff]
  %v36 = vld [vmem:[%s1 + $0x18] sm:$0xff]
  %v37 = vld [vmem:[%s1 + $0x20] sm:$0xff]
  %v38 = vld [vmem:[%s1 + $0x28] sm:$0xff]
  %v39 = vld [vmem:[%s1 + $0x30] sm:$0xff]
  %v40 = vld [vmem:[%s1 + $0x38] sm:$0xff]
  %v41 = vld [vmem:[%s1 + $0x40] sm:$0xff]
  %v42 = vld [vmem:[%s1 + $0x48] sm:$0xff]
  %v43 = vld [vmem:[%s1 + $0x50] sm:$0xff]
  %v44 = vld [vmem:[%s1 + $0x58] sm:$0xff]
  %v45 = vld [vmem:[%s1 + $0x60] sm:$0xff]
  %v46 = vld [vmem:[%s1 + $0x68] sm:$0xff]
  %v47 = vld [vmem:[%s1 + $0x70] sm:$0xff]
  %v48 = vld [vmem:[%s1 + $0x78] sm:$0xff]
  %v49 = vld [vmem:[%s1 + $0x80] sm:$0xff]
  %v50 = vld [vmem:[%s1 + $0x88] sm:$0xff]
  %v51 = vld [vmem:[%s1 + $0x90] sm:$0xff]
  %v52 = vld [vmem:[%s1 + $0x98] sm:$0xff]
  %v53 = vld [vmem:[%s1 + $0xa0] sm:$0xff]
  %v54 = vld [vmem:[%s1 + $0xa8] sm:$0xff]
  %v55 = vld [vmem:[%s1 + $0xb0] sm:$0xff]
  %v56 = vld [vmem:[%s1 + $0xb8] sm:$0xff]
  %v57 = vld [vmem:[%s1 + $0xc0] sm:$0xff]
  %v58 = vld [vmem:[%s1 + $0xc8] sm:$0xff]
  %v59 = vld [vmem:[%s1 + $0xd0] sm:$0xff]
  %v60 = vld [vmem:[%s1 + $0xd8] sm:$0xff]
  %v61 = vld [vmem:[%s1 + $0xe0] sm:$0xff]
  %v62 = vld [vmem:[%s1 + $0xe8] sm:$0xff]
  %v63 = vld [vmem:[%s1 + $0xf0] sm:$0xff]
  %v64 = vld [vmem:[%s1 + $0xf8] sm:$0xff]
  %v65 = vld [vmem:[%s1 + $0x100] sm:$0xff]
  %v66 = vld [vmem:[%s1 + $0x108] sm:$0xff]
  %v67 = vld [vmem:[%s1 + $0x110] sm:$0xff]
  %v68 = vld [vmem:[%s1 + $0x118] sm:$0xff]
  %v69 = vld [vmem:[%s1 + $0x120] sm:$0xff]
  %v70 = vld [vmem:[%s1 + $0x128] sm:$0xff]
  %v71 = vld [vmem:[%s1 + $0x130] sm:$0xff]
  %v72 = vld [vmem:[%s1 + $0x138] sm:$0xff]
  %v73 = vld [vmem:[%s1 + $0x140] sm:$0xff]
  %v74 = vld [vmem:[%s1 + $0x148] sm:$0xff]
  %v75 = vld [vmem:[%s1 + $0x150] sm:$0xff]
  %v76 = vld [vmem:[%s1 + $0x158] sm:$0xff]
  %v77 = vld [vmem:[%s1 + $0x160] sm:$0xff]
  %v78 = vld [vmem:[%s1 + $0x168] sm:$0xff]
  %v79 = vld [vmem:[%s1 + $0x170] sm:$0xff]
  %v80 = vld [vmem:[%s1 + $0x178] sm:$0xff]
  %v81 = vld [vmem:[%s1 + $0x180] sm:$0xff]
  %v82 = vld [vmem:[%s1 + $0x188] sm:$0xff]
  %v83 = vld [vmem:[%s1 + $0x190] sm:$0xff]
  %v84 = vld [vmem:[%s1 + $0x198] sm:$0xff]
  %v85 = vld [vmem:[%s1 + $0x1a0] sm:$0xff]
  %v86 = vld [vmem:[%s1 + $0x1a8] sm:$0xff]
  %v87 = vld [vmem:[%s1 + $0x1b0] sm:$0xff]
  %v88 = vld [vmem:[%s1 + $0x1b8] sm:$0xff]
  %v89 = vld [vmem:[%s1 + $0x1c0] sm:$0xff]
  %v90 = vld [vmem:[%s1 + $0x1c8] sm:$0xff]
  %v91 = vld [vmem:[%s1 + $0x1d0] sm:$0xff]
  %v92 = vld [vmem:[%s1 + $0x1d8] sm:$0xff]
  %v93 = vld [vmem:[%s1 + $0x1e0] sm:$0xff]
  %v94 = vld [vmem:[%s1 + $0x1e8] sm:$0xff]
  %v95 = vld [vmem:[%s1 + $0x1f0] sm:$0xff]
  %v96 = vld [vmem:[%s1 + $0x1f8] sm:$0xff]
  %v97 = vld [vmem:[%s1 + $0x200] sm:$0xff]
  %v98 = vld [vmem:[%s1 + $0x208] sm:$0xff]
  %v99 = vld [vmem:[%s1 + $0x210] sm:$0xff]
  %v100 = vld [vmem:[%s1 + $0x218] sm:$0xff]
  %v101 = vld [vmem:[%s1 + $0x220] sm:$0xff]
  %v102 = vld [vmem:[%s1 + $0x228] sm:$0xff]
  %v103 = vld [vmem:[%s1 + $0x230] sm:$0xff]
  %v104 = vld [vmem:[%s1 + $0x238] sm:$0xff]
  %v105 = vld [vmem:[%s1 + $0x240] sm:$0xff]
  %v106 = vld [vmem:[%s1 + $0x248] sm:$0xff]
  %v107 = vld [vmem:[%s1 + $0x250] sm:$0xff]
  %v108 = vld [vmem:[%s1 + $0x258] sm:$0xff]
  %v109 = vld [vmem:[%s1 + $0x260] sm:$0xff]
  %v110 = vld [vmem:[%s1 + $0x268] sm:$0xff]
  %v111 = vld [vmem:[%s1 + $0x270] sm:$0xff]
  %v112 = vld [vmem:[%s1 + $0x278] sm:$0xff]
  %v113 = vld [vmem:[%s1 + $0x280] sm:$0xff]
  %v114 = vld [vmem:[%s1 + $0x288] sm:$0xff]
  %v115 = vld [vmem:[%s1 + $0x290] sm:$0xff]
  %v116 = vld [vmem:[%s1 + $0x298] sm:$0xff]
  %v117 = vld [vmem:[%s1 + $0x2a0] sm:$0xff]
  %v118 = vld [vmem:[%s1 + $0x2a8] sm:$0xff]
  %v119 = vld [vmem:[%s1 + $0x2b0] sm:$0xff]
  %v120 = vld [vmem:[%s1 + $0x2b8] sm:$0xff]
  %v121 = vld [vmem:[%s1 + $0x2c0] sm:$0xff]
  %v122 = vld [vmem:[%s1 + $0x2c8] sm:$0xff]
  %v123 = vld [vmem:[%s1 + $0x2d0] sm:$0xff]
  %v124 = vld [vmem:[%s1 + $0x2d8] sm:$0xff]
  %v125 = vld [vmem:[%s1 + $0x2e0] sm:$0xff]
  %v126 = vld [vmem:[%s1 + $0x2e8] sm:$0xff]
  %v127 = vld [vmem:[%s1 + $0x2f0] sm:$0xff]
  %v128 = vld [vmem:[%s1 + $0x2f8] sm:$0xff]
  %v129 = vld [vmem:[%s1 + $0x300] sm:$0xff]
  %v130 = vld [vmem:[%s1 + $0x308] sm:$0xff]
  %v131 = vld [vmem:[%s1 + $0x310] sm:$0xff]
  %v132 = vld [vmem:[%s1 + $0x318] sm:$0xff]
  %v133 = vld [vmem:[%s1 + $0x320] sm:$0xff]
  %v134 = vld [vmem:[%s1 + $0x328] sm:$0xff]
  %v135 = vld [vmem:[%s1 + $0x330] sm:$0xff]
  %v136 = vld [vmem:[%s1 + $0x338] sm:$0xff]
  %v137 = vld [vmem:[%s1 + $0x340] sm:$0xff]
  %v138 = vld [vmem:[%s1 + $0x348] sm:$0xff]
  %v139 = vld [vmem:[%s1 + $0x350] sm:$0xff]
  %v140 = vld [vmem:[%s1 + $0x358] sm:$0xff]
  %v141 = vld [vmem:[%s1 + $0x360] sm:$0xff]
  %v142 = vld [vmem:[%s1 + $0x368] sm:$0xff]
  %v143 = vld [vmem:[%s1 + $0x370] sm:$0xff]
  %v144 = vld [vmem:[%s1 + $0x378] sm:$0xff]
  %v145 = vld [vmem:[%s1 + $0x380] sm:$0xff]
  %v146 = vld [vmem:[%s1 + $0x388] sm:$0xff]
  %v147 = vld [vmem:[%s1 + $0x390] sm:$0xff]
  %v148 = vld [vmem:[%s1 + $0x398] sm:$0xff]
  %v149 = vld [vmem:[%s1 + $0x3a0] sm:$0xff]
  %v150 = vld [vmem:[%s1 + $0x3a8] sm:$0xff]
  %v151 = vld [vmem:[%s1 + $0x3b0] sm:$0xff]
  %v152 = vld [vmem:[%s1 + $0x3b8] sm:$0xff]
  %v153 = vld [vmem:[%s1 + $0x3c0] sm:$0xff]
  %v154 = vld [vmem:[%s1 + $0x3c8] sm:$0xff]
  %v155 = vld [vmem:[%s1 + $0x3d0] sm:$0xff]
  %v156 = vld [vmem:[%s1 + $0x3d8] sm:$0xff]
  %v157 = vld [vmem:[%s1 + $0x3e0] sm:$0xff]
  %v158 = vld [vmem:[%s1 + $0x3e8] sm:$0xff]
  %v159 = vld [vmem:[%s1 + $0x3f0] sm:$0xff]
  %v160 = vld [vmem:[%s1 + $0x3f8] sm:$0xff]
  %161 = vmatpush.msra.mxu0 %v48
  %162 = vmatpush.msra.mxu0 %v47
  %163 = vmatpush.msra.mxu0 %v46
  %164 = vmatpush.msra.mxu0 %v45
  %165 = vmatpush.msra.mxu0 %v44
  %166 = vmatpush.msra.mxu0 %v43
  %167 = vmatpush.msra.mxu0 %v42
  %168 = vmatpush.msra.mxu0 %v41
  %169 = vmatpush.msra.mxu0 %v40
  %170 = vmatpush.msra.mxu0 %v39
  %171 = vmatpush.msra.mxu0 %v38
  %172 = vmatpush.msra.mxu0 %v37
  %173 = vmatpush.msra.mxu0 %v36
  %174 = vmatpush.msra.mxu0 %v35
  %175 = vmatpush.msra.mxu0 %v34
  %176 = vmatpush.msra.mxu0 %v33
  %177 = vmatmul.f32.gmra.mxu0 %v25
  %v178 = vpop.f32.mrf.mxu0
  %v179 = vadd.f32 0.0, %v178
  %180 = vdwg.mxu0
  %181 = vmatpush.msra.mxu0 %v64
  %182 = vmatpush.msra.mxu0 %v63
  %183 = vmatpush.msra.mxu0 %v62
  %184 = vmatpush.msra.mxu0 %v61
  %185 = vmatpush.msra.mxu0 %v60
  %186 = vmatpush.msra.mxu0 %v59
  %187 = vmatpush.msra.mxu0 %v58
  %188 = vmatpush.msra.mxu0 %v57
  %189 = vmatpush.msra.mxu0 %v56
  %190 = vmatpush.msra.mxu0 %v55
  %191 = vmatpush.msra.mxu0 %v54
  %192 = vmatpush.msra.mxu0 %v53
  %193 = vmatpush.msra.mxu0 %v52
  %194 = vmatpush.msra.mxu0 %v51
  %195 = vmatpush.msra.mxu0 %v50
  %196 = vmatpush.msra.mxu0 %v49
  %197 = vmatmul.f32.gmra.mxu0 %v26
  %v198 = vpop.f32.mrf.mxu0
  %v199 = vadd.f32 %v179, %v198
  %200 = vdwg.mxu0
  %201 = vmatpush.msra.mxu0 %v80
  %202 = vmatpush.msra.mxu0 %v79
  %203 = vmatpush.msra.mxu0 %v78
  %204 = vmatpush.msra.mxu0 %v77
  %205 = vmatpush.msra.mxu0 %v76
  %206 = vmatpush.msra.mxu0 %v75
  %207 = vmatpush.msra.mxu0 %v74
  %208 = vmatpush.msra.mxu0 %v73
  %209 = vmatpush.msra.mxu0 %v72
  %210 = vmatpush.msra.mxu0 %v71
  %211 = vmatpush.msra.mxu0 %v70
  %212 = vmatpush.msra.mxu0 %v69
  %213 = vmatpush.msra.mxu0 %v68
  %214 = vmatpush.msra.mxu0 %v67
  %215 = vmatpush.msra.mxu0 %v66
  %216 = vmatpush.msra.mxu0 %v65
  %217 = vmatmul.f32.gmra.mxu0 %v27
  %v218 = vpop.f32.mrf.mxu0
  %v219 = vadd.f32 %v199, %v218
  %220 = vdwg.mxu0
  %221 = vmatpush.msra.mxu0 %v96
  %222 = vmatpush.msra.mxu0 %v95
  %223 = vmatpush.msra.mxu0 %v94
  %224 = vmatpush.msra.mxu0 %v93
  %225 = vmatpush.msra.mxu0 %v92
  %226 = vmatpush.msra.mxu0 %v91
  %227 = vmatpush.msra.mxu0 %v90
  %228 = vmatpush.msra.mxu0 %v89
  %229 = vmatpush.msra.mxu0 %v88
  %230 = vmatpush.msra.mxu0 %v87
  %231 = vmatpush.msra.mxu0 %v86
  %232 = vmatpush.msra.mxu0 %v85
  %233 = vmatpush.msra.mxu0 %v84
  %234 = vmatpush.msra.mxu0 %v83
  %235 = vmatpush.msra.mxu0 %v82
  %236 = vmatpush.msra.mxu0 %v81
  %237 = vmatmul.f32.gmra.mxu0 %v28
  %v238 = vpop.f32.mrf.mxu0
  %v239 = vadd.f32 %v219, %v238
  %240 = vdwg.mxu0
  %241 = vmatpush.msra.mxu0 %v112
  %242 = vmatpush.msra.mxu0 %v111
  %243 = vmatpush.msra.mxu0 %v110
  %244 = vmatpush.msra.mxu0 %v109
  %245 = vmatpush.msra.mxu0 %v108
  %246 = vmatpush.msra.mxu0 %v107
  %247 = vmatpush.msra.mxu0 %v106
  %248 = vmatpush.msra.mxu0 %v105
  %249 = vmatpush.msra.mxu0 %v104
  %250 = vmatpush.msra.mxu0 %v103
  %251 = vmatpush.msra.mxu0 %v102
  %252 = vmatpush.msra.mxu0 %v101
  %253 = vmatpush.msra.mxu0 %v100
  %254 = vmatpush.msra.mxu0 %v99
  %255 = vmatpush.msra.mxu0 %v98
  %256 = vmatpush.msra.mxu0 %v97
  %257 = vmatmul.f32.gmra.mxu0 %v29
  %v258 = vpop.f32.mrf.mxu0
  %v259 = vadd.f32 %v239, %v258
  %260 = vdwg.mxu0
  %261 = vmatpush.msra.mxu0 %v128
  %262 = vmatpush.msra.mxu0 %v127
  %263 = vmatpush.msra.mxu0 %v126
  %264 = vmatpush.msra.mxu0 %v125
  %265 = vmatpush.msra.mxu0 %v124
  %266 = vmatpush.msra.mxu0 %v123
  %267 = vmatpush.msra.mxu0 %v122
  %268 = vmatpush.msra.mxu0 %v121
  %269 = vmatpush.msra.mxu0 %v120
  %270 = vmatpush.msra.mxu0 %v119
  %271 = vmatpush.msra.mxu0 %v118
  %272 = vmatpush.msra.mxu0 %v117
  %273 = vmatpush.msra.mxu0 %v116
  %274 = vmatpush.msra.mxu0 %v115
  %275 = vmatpush.msra.mxu0 %v114
  %276 = vmatpush.msra.mxu0 %v113
  %277 = vmatmul.f32.gmra.mxu0 %v30
  %v278 = vpop.f32.mrf.mxu0
  %v279 = vadd.f32 %v259, %v278
  %280 = vdwg.mxu0
  %281 = vmatpush.msra.mxu0 %v144
  %282 = vmatpush.msra.mxu0 %v143
  %283 = vmatpush.msra.mxu0 %v142
  %284 = vmatpush.msra.mxu0 %v141
  %285 = vmatpush.msra.mxu0 %v140
  %286 = vmatpush.msra.mxu0 %v139
  %287 = vmatpush.msra.mxu0 %v138
  %288 = vmatpush.msra.mxu0 %v137
  %289 = vmatpush.msra.mxu0 %v136
  %290 = vmatpush.msra.mxu0 %v135
  %291 = vmatpush.msra.mxu0 %v134
  %292 = vmatpush.msra.mxu0 %v133
  %293 = vmatpush.msra.mxu0 %v132
  %294 = vmatpush.msra.mxu0 %v131
  %295 = vmatpush.msra.mxu0 %v130
  %296 = vmatpush.msra.mxu0 %v129
  %297 = vmatmul.f32.gmra.mxu0 %v31
  %v298 = vpop.f32.mrf.mxu0
  %v299 = vadd.f32 %v279, %v298
  %300 = vdwg.mxu0
  %301 = vmatpush.msra.mxu0 %v160
  %302 = vmatpush.msra.mxu0 %v159
  %303 = vmatpush.msra.mxu0 %v158
  %304 = vmatpush.msra.mxu0 %v157
  %305 = vmatpush.msra.mxu0 %v156
  %306 = vmatpush.msra.mxu0 %v155
  %307 = vmatpush.msra.mxu0 %v154
  %308 = vmatpush.msra.mxu0 %v153
  %309 = vmatpush.msra.mxu0 %v152
  %310 = vmatpush.msra.mxu0 %v151
  %311 = vmatpush.msra.mxu0 %v150
  %312 = vmatpush.msra.mxu0 %v149
  %313 = vmatpush.msra.mxu0 %v148
  %314 = vmatpush.msra.mxu0 %v147
  %315 = vmatpush.msra.mxu0 %v146
  %316 = vmatpush.msra.mxu0 %v145
  %317 = vmatmul.f32.gmra.mxu0 %v32
  %v318 = vpop.f32.mrf.mxu0
  %v319 = vadd.f32 %v299, %v318
  %320 = vdwg.mxu0
  %v321 = vadd.f32 %v24, %v319
  %vm322 = vcmask 261120
  %323 = vst.msk [vmem:[#allocation2] sm:$0xff] %vm322, %v321
  // Predicated region
  $region18: #{fully_connected.1} parent=0 // pred_check
    %p324 = pneg %p14
  $region19: #{fully_connected.1} parent=0 // pred_check_branch
    %326 = sbr.rel (%p324) target = $region21
  $region20: #{fully_connected.1} parent=0 // pred_region
    %v327 = vld [vmem:[#allocation2] sm:$0xff]
    %328 = vst.msk [vmem:[%s3] sm:$0xff] %vm322, %v327
  $region21: #{fully_connected.1} parent=0 // pred_fallthru
    _
  // Predicated region
  $region22: #{fully_connected.1} parent=0 // pred_check
    _
  $region23: #{fully_connected.1} parent=0 // pred_check_branch
    %330 = sbr.rel (0) target = $region25
  $region24: #{fully_connected.1} parent=0 // pred_region
    _
  $region25: #{fully_connected.1} parent=0 // pred_fallthru
    _
  // Predicated region
  $region26: #{fully_connected.1} parent=0 // pred_check
    _
  $region27: #{fully_connected.1} parent=0 // pred_check_branch
    %332 = sbr.rel (0) target = $region29
  $region28: #{fully_connected.1} parent=0 // pred_region
    _
  $region29: #{fully_connected.1} parent=0 // pred_fallthru
    _

</llo_original>
